<compile_context>
chip_gen: v5e
topology: v5e:2x2
jax: 0.10.0
libtpu: 0.0.40
codegen_flags: <defaults>
</compile_context>

<pallas_src>
import functools

import jax
import jax.numpy as jnp
from jax.experimental import pallas as pl
from jax.experimental.pallas import tpu as pltpu

KH = KW = 3  # conv kernel size, padding = 1


def _tta_conv_kernel(x_ref, w_ref, b_ref, o_ref, *, B_TILE, H, WCout):
    """One grid step = B_TILE images.

    x_ref : (B_TILE*H, W*Cin)    bf16 images, channels innermost   (VMEM)
    w_ref : (W*Cin, KH*W*Cout)   bf16 folded conv+TTA weights      (VMEM)
    b_ref : (1, W*Cout)          f32  folded bias row              (VMEM)
    o_ref : (B_TILE*H, W*Cout)   bf16 lane-dense TTA output        (VMEM)
    """
    M = B_TILE * H

    # One MXU matmul covers both TTA branches, all kw taps and all B_TILE
    # images, for the three kh row offsets (column blocks [kh*WCout:...]).
    r = jnp.dot(x_ref[...], w_ref[...], preferred_element_type=jnp.float32)

    r0 = r[:, :WCout]            # kh = 0 contribution: rows shift down by 1
    r1 = r[:, WCout:2 * WCout]   # kh = 1 contribution: aligned
    r2 = r[:, 2 * WCout:]        # kh = 2 contribution: rows shift up by 1

    # Row-within-image index; the (B_TILE, H, WCout) -> (M, WCout) collapse is
    # a free view since H % 8 == 0. Used to zero rows that would wrap across
    # image / zero-padding boundaries after the rolls.
    row = jax.lax.broadcasted_iota(
        jnp.int32, (B_TILE, H, WCout), 1).reshape(M, WCout)

    # Sublane rotations run in the XLU slot, the masks in the VPU slot — both
    # have slack next to the MXU, so this epilogue is essentially free.
    top = jnp.where(row > 0, pltpu.roll(r0, shift=1, axis=0), 0.0)
    bot = jnp.where(row < H - 1, pltpu.roll(r2, shift=M - 1, axis=0), 0.0)

    o_ref[...] = (r1 + top + bot + b_ref[...]).astype(o_ref.dtype)


def _build_tta_weights(w_hwio, mult_fact, W):
    """Fold the 3x3 conv taps, the W-flip TTA branch and the mult_fact/0.5
    combine into one block-Toeplitz matrix of shape (W*Cin, KH*W*Cout)."""
    kh_n, kw_n, Cin, Cout = w_hwio.shape
    a = 0.5 * float(mult_fact)   # scale of the direct branch
    b = 0.5                      # scale of the flipped branch
    blocks = []
    for kh in range(kh_n):
        blk = jnp.zeros((W * Cin, W * Cout), dtype=jnp.float32)
        for kw in range(kw_n):
            wk = w_hwio[kh, kw].astype(jnp.float32)                  # (Cin, Cout)
            # direct branch: input col wi feeds output col wo when wi = wo+kw-1
            d_sel = jnp.eye(W, W, k=1 - kw, dtype=jnp.float32)
            # flipped branch: conv(flip_W(x)) hits output wo when wi+wo = W-kw
            f_sel = jnp.fliplr(jnp.eye(W, W, k=kw - 1, dtype=jnp.float32))
            blk = blk + jnp.kron(a * d_sel + b * f_sel, wk)
        blocks.append(blk)
    return jnp.concatenate(blocks, axis=1)                           # (W*Cin, KH*W*Cout)


def _pick_batch_tile(N, H, target_m=256):
    """Largest divisor of N keeping the matmul M dim (B*H) near target_m
    (256 fills a v6e/v7x MXU pass; v5e only needs 128)."""
    cap = max(1, -(-target_m // H))
    best = 1
    for b in range(1, N + 1):
        if N % b == 0 and b <= cap:
            best = b
    return best


def model_with_tta(x_nchw, w_hwio, bias, mult_fact=1.0):
    """x_nchw: (N, Cin, H, W) f32 -> (N, Cout, H, W) f32."""
    N, Cin, H, W = x_nchw.shape
    Cout = w_hwio.shape[-1]
    assert H % 8 == 0, "H must be a multiple of the sublane tile (8)"

    # Pad Cout so W*Cout is a multiple of 128: lane-dense output stores and
    # 128-aligned kh column slices inside the kernel.
    Cout_p = Cout
    while (W * Cout_p) % 128 != 0:
        Cout_p += 1
    if Cout_p != Cout:
        w_hwio = jnp.pad(w_hwio, ((0, 0), (0, 0), (0, 0), (0, Cout_p - Cout)))
        bias = jnp.pad(bias, (0, Cout_p - Cout))

    WCin, WCout = W * Cin, W * Cout_p
    B_TILE = _pick_batch_tile(N, H)
    TILE_M = B_TILE * H

    # Layout plumbing only (single XLA copy): NCHW -> (N*H, W*Cin), bf16.
    x_flat = jnp.transpose(x_nchw, (0, 2, 3, 1)).reshape(N * H, WCin)
    x_flat = x_flat.astype(jnp.bfloat16)

    w_big = _build_tta_weights(w_hwio, mult_fact, W).astype(jnp.bfloat16)
    bias_row = jnp.tile(bias.astype(jnp.float32) * (0.5 * (mult_fact + 1.0)), W)
    bias_row = bias_row.reshape(1, WCout)

    kernel = functools.partial(
        _tta_conv_kernel, B_TILE=B_TILE, H=H, WCout=WCout)

    # TODO(synk): for large W/C the block-Toeplitz weight (2*W*Cin*3*W*Cout B)
    # no longer fits v7x's 64 MiB VMEM — add a weight column/K grid axis to
    # stream tiles from HBM, and single-buffer the constant weight/bias blocks
    # (pipeline_mode=pl.Buffered(1)); also cap B_TILE against VMEM then.
    out_flat = pl.pallas_call(
        kernel,
        out_shape=jax.ShapeDtypeStruct((N * H, WCout), jnp.bfloat16),
        grid_spec=pltpu.PrefetchScalarGridSpec(
            num_scalar_prefetch=0,
            grid=(N // B_TILE,),
            in_specs=[
                pl.BlockSpec((TILE_M, WCin), lambda i: (i, 0)),
                pl.BlockSpec((WCin, KH * WCout), lambda i: (0, 0)),
                pl.BlockSpec((1, WCout), lambda i: (0, 0)),
            ],
            out_specs=pl.BlockSpec((TILE_M, WCout), lambda i: (i, 0)),
        ),
        compiler_params=pltpu.CompilerParams(
            dimension_semantics=("parallel",),
            vmem_limit_bytes=48 * 1024 * 1024),
    )(x_flat, w_big, bias_row)

    # (N*H, W*Cout_p) bf16 -> NCHW f32. The kernel's HBM writeback stays bf16;
    # this cast exists only for dtype parity with the f32 PyTorch module.
    out = out_flat.reshape(N, H, W, Cout_p)[..., :Cout].astype(jnp.float32)
    return jnp.transpose(out, (0, 3, 1, 2))


def _reference(x_nchw, w_hwio, bias, mult_fact):
    """Plain-JAX (f32) reference for the same forward pass."""
    def conv(x):
        y = jax.lax.conv_general_dilated(
            x, jnp.transpose(w_hwio, (3, 2, 0, 1)),          # HWIO -> OIHW
            window_strides=(1, 1), padding=((1, 1), (1, 1)),
            dimension_numbers=("NCHW", "OIHW", "NCHW"))
        return y + bias.reshape(1, -1, 1, 1)
    out = conv(x_nchw) * mult_fact
    out = out + conv(x_nchw[:, :, :, ::-1])
    return out / 2.0


if __name__ == "__main__":
    N, Cin, H, W, Cout = 2, 4, 16, 16, 8
    mult_fact = 1.5

    key = jax.random.PRNGKey(0)
    kx, kwt, kb = jax.random.split(key, 3)
    x = jax.random.normal(kx, (N, Cin, H, W), dtype=jnp.float32)
    w = jax.random.normal(kwt, (KH, KW, Cin, Cout), dtype=jnp.float32) * 0.1
    b = jax.random.normal(kb, (Cout,), dtype=jnp.float32) * 0.1

    out = model_with_tta(x, w, b, mult_fact)
    out = jax.block_until_ready(out)

    ref = _reference(x, w, b, mult_fact)
    assert out.shape == (N, Cout, H, W)
    # bf16 operands + bf16 output store with f32 accumulation -> loose-but-
    # meaningful tolerance.
    assert jnp.allclose(out, ref, atol=5e-2, rtol=5e-2), \
        float(jnp.max(jnp.abs(out - ref)))

    print("KERNEL_OK")
</pallas_src>

<mosaic_0001>
module attributes {stable_mosaic.version = 11 : i64} {
  func.func @_tta_conv_kernel(%arg0: i32, %arg1: memref<32x64xbf16, #tpu.memory_space<vmem>>, %arg2: memref<64x384xbf16, #tpu.memory_space<vmem>>, %arg3: memref<1x128xf32, #tpu.memory_space<vmem>>, %arg4: memref<32x128xbf16, #tpu.memory_space<vmem>>) attributes {dimension_semantics = [#tpu.dimension_semantics<parallel>], iteration_bounds = array<i64: 1>, scalar_prefetch = 0 : i64, scratch_operands = 0 : i64, tpu.core_type = #tpu.core_type<tc>, window_params = [{transform_indices = @transform_0, window_bounds = array<i64: 32, 64>}, {pipeline_mode = #tpu.pipeline_mode<synchronous>, transform_indices = @transform_1, window_bounds = array<i64: 64, 384>}, {pipeline_mode = #tpu.pipeline_mode<synchronous>, transform_indices = @transform_2, window_bounds = array<i64: 1, 128>}, {transform_indices = @transform_3, window_bounds = array<i64: 32, 128>}]} {
    %c0 = arith.constant 0 : index
    %c0_0 = arith.constant 0 : index
    %0 = vector.load %arg1[%c0, %c0_0] : memref<32x64xbf16, #tpu.memory_space<vmem>>, vector<32x64xbf16>
    %c0_1 = arith.constant 0 : index
    %c0_2 = arith.constant 0 : index
    %1 = vector.load %arg2[%c0_1, %c0_2] : memref<64x384xbf16, #tpu.memory_space<vmem>>, vector<64x384xbf16>
    %cst = arith.constant dense<0.000000e+00> : vector<32x384xf32>
    %2 = tpu.matmul %0, %1, %cst {dimension_numbers = #tpu.dot_dimension_numbers<[1], [0], [0], [1], [0, 0, 1, 1], [], []>} : vector<32x64xbf16>, vector<64x384xbf16>, vector<32x384xf32> -> vector<32x384xf32>
    %3 = vector.extract_strided_slice %2 {offsets = [0, 0], sizes = [32, 128], strides = [1, 1]} : vector<32x384xf32> to vector<32x128xf32>
    %4 = vector.extract_strided_slice %2 {offsets = [0, 128], sizes = [32, 128], strides = [1, 1]} : vector<32x384xf32> to vector<32x128xf32>
    %5 = vector.extract_strided_slice %2 {offsets = [0, 256], sizes = [32, 128], strides = [1, 1]} : vector<32x384xf32> to vector<32x128xf32>
    %6 = tpu.iota {dimensions = array<i32: 1>} : vector<2x16x128xi32>
    %7 = vector.shape_cast %6 : vector<2x16x128xi32> to vector<32x128xi32>
    %c0_i32 = arith.constant 0 : i32
    %8 = vector.broadcast %c0_i32 : i32 to vector<32x128xi32>
    %9 = arith.cmpi sgt, %7, %8 : vector<32x128xi32>
    %c1_i32 = arith.constant 1 : i32
    %10 = tpu.dynamic_rotate %3 by %c1_i32 dim 0 : vector<32x128xf32>, i32 -> vector<32x128xf32>
    %cst_3 = arith.constant 0.000000e+00 : f32
    %11 = vector.broadcast %cst_3 : f32 to vector<32x128xf32>
    %12 = arith.select %9, %10, %11 : vector<32x128xi1>, vector<32x128xf32>
    %c15_i32 = arith.constant 15 : i32
    %13 = vector.broadcast %c15_i32 : i32 to vector<32x128xi32>
    %14 = arith.cmpi slt, %7, %13 : vector<32x128xi32>
    %c31_i32 = arith.constant 31 : i32
    %15 = tpu.dynamic_rotate %5 by %c31_i32 dim 0 : vector<32x128xf32>, i32 -> vector<32x128xf32>
    %cst_4 = arith.constant 0.000000e+00 : f32
    %16 = vector.broadcast %cst_4 : f32 to vector<32x128xf32>
    %17 = arith.select %14, %15, %16 : vector<32x128xi1>, vector<32x128xf32>
    %18 = arith.addf %4, %12 : vector<32x128xf32>
    %19 = arith.addf %18, %17 : vector<32x128xf32>
    %c0_5 = arith.constant 0 : index
    %c0_6 = arith.constant 0 : index
    %20 = vector.load %arg3[%c0_5, %c0_6] : memref<1x128xf32, #tpu.memory_space<vmem>>, vector<1x128xf32>
    %21 = vector.broadcast %20 : vector<1x128xf32> to vector<32x128xf32>
    %22 = arith.addf %19, %21 : vector<32x128xf32>
    %23 = arith.truncf %22 : vector<32x128xf32> to vector<32x128xbf16>
    %c0_7 = arith.constant 0 : index
    %c0_8 = arith.constant 0 : index
    %24 = vector.load %arg4[%c0_7, %c0_8] : memref<32x128xbf16, #tpu.memory_space<vmem>>, vector<32x128xbf16>
    tpu.vector_store %arg4[%c0_7, %c0_8], %23 {strides = array<i32>} : memref<32x128xbf16, #tpu.memory_space<vmem>>, vector<32x128xbf16>,
    return
  }
  func.func @transform_0(%arg0: i32) -> (i32, i32) {
    %c0_i32 = arith.constant 0 : i32
    %c0_i32_0 = arith.constant 0 : i32
    return %arg0, %c0_i32 : i32, i32
  }
  func.func @transform_1(%arg0: i32) -> (i32, i32) {
    %c0_i32 = arith.constant 0 : i32
    %c0_i32_0 = arith.constant 0 : i32
    %c0_i32_1 = arith.constant 0 : i32
    return %c0_i32, %c0_i32_0 : i32, i32
  }
  func.func @transform_2(%arg0: i32) -> (i32, i32) {
    %c0_i32 = arith.constant 0 : i32
    %c0_i32_0 = arith.constant 0 : i32
    %c0_i32_1 = arith.constant 0 : i32
    return %c0_i32, %c0_i32_0 : i32, i32
  }
  func.func @transform_3(%arg0: i32) -> (i32, i32) {
    %c0_i32 = arith.constant 0 : i32
    %c0_i32_0 = arith.constant 0 : i32
    return %arg0, %c0_i32 : i32, i32
  }
}

</mosaic_0001>

<llo_original>
// kernel: tpu_custom_call.1
$region0: #{tpu_custom_call.1}
  #allocation0 [shape = 'u32[]', space=smem, size = 0x4, offset = 0x4, fixed_abs, tag = 'smem constant byte address 0x4 - core index']
  #allocation1 [shape = 'u32[72,128]{1,0:T(1,128)}', space=vmem, size = 0x9000, scoped, tag = 'internal scratch']
  %s0 = inlined_call_operand.hbm [shape: bf16[32,64], index: 0, kind: input, shape index: {}]
  %s1 = inlined_call_operand.hbm [shape: bf16[64,384], index: 1, kind: input, shape index: {}]
  %s2 = inlined_call_operand.vmem [shape: f32[1,128], index: 2, kind: input, shape index: {}]
  %s3 = inlined_call_operand.hbm [shape: bf16[32,128], index: 3, kind: output, shape index: {}]
  %s4 = sld [smem:[#allocation0]]
  $region30: #{tpu_custom_call.1} parent=0
    _
  %s6 = ssub.s32 1, %s4
  %s7 = scalar_select 0, %s6, %s4
  $region1: #{tpu_custom_call.1} parent=0
    #allocation2 [shape = 'u8[8192]{0}', space=vmem, size = 0x2000, scoped, tag = 'input window, operand 0, single buffered']
    #allocation3 [shape = 's32[1]{0}', space=sflag, size = 0x4, scoped, tag = 'scoped memory for tpu_custom_call.1']
    #allocation4 [shape = 's32[1]{0}', space=sflag, size = 0x4, scoped, tag = 'scoped memory for tpu_custom_call.1']
    #allocation5 [shape = 'u8[49152]{0}', space=vmem, size = 0xc000, scoped, tag = 'input window, operand 1, single buffered']
    #allocation6 [shape = 's32[1]{0}', space=sflag, size = 0x4, scoped, tag = 'scoped memory for tpu_custom_call.1']
    #allocation7 [shape = 'u8[8192]{0}', space=vmem, size = 0x2000, scoped, tag = 'output window, operand 0, single buffered']
    %8 = vsyncpa [#allocation3], 0
    %9 = vsyncpa [#allocation6], 0
    %10 = vsyncpa [#allocation4], 0
    // Predicated region
    $region2: #{tpu_custom_call.1} parent=1 // pred_check
      _
    $region3: #{tpu_custom_call.1} parent=1 // pred_check_branch
      %12 = sbr.rel (0) target = $region5
    $region4: #{tpu_custom_call.1} parent=1 // pred_region
      %14 = vsyncadd [#allocation3], 0
      %s15 = sshll.u32 %s0, 4
      %s16 = int_to_ptr.hbm [resolvable:$true] %s15
      %s17 = sshll.u32 [#allocation2], 4
      %s18 = int_to_ptr.vmem [resolvable:$true] %s17
      %23 = dma.hbm_to_vmem [thread:$0]  %s16, 256, %s18, [#allocation3], 64, 64, 4
    $region5: #{tpu_custom_call.1} parent=1 // pred_fallthru
      _
    // Predicated region
    $region6: #{tpu_custom_call.1} parent=1 // pred_check
      _
    $region7: #{tpu_custom_call.1} parent=1 // pred_check_branch
      %25 = sbr.rel (0) target = $region9
    $region8: #{tpu_custom_call.1} parent=1 // pred_region
      %27 = vsyncadd [#allocation6], 0
      %s28 = sshll.u32 %s1, 4
      %s29 = int_to_ptr.hbm [resolvable:$true] %s28
      %s30 = sshll.u32 [#allocation5], 4
      %s31 = int_to_ptr.vmem [resolvable:$true] %s30
      %36 = dma.hbm_to_vmem [thread:$0]  %s29, 1536, %s31, [#allocation6], 192, 192, 12
    $region9: #{tpu_custom_call.1} parent=1 // pred_fallthru
      _
    // Predicated region
    $region10: #{tpu_custom_call.1} parent=1 // pred_check
      _
    $region11: #{tpu_custom_call.1} parent=1 // pred_check_branch
      %38 = sbr.rel (0) target = $region13
    $region12: #{tpu_custom_call.1} parent=1 // pred_region
      _
    $region13: #{tpu_custom_call.1} parent=1 // pred_fallthru
      _
    // Predicated region
    $region14: #{tpu_custom_call.1} parent=1 // pred_check
      _
    $region15: #{tpu_custom_call.1} parent=1 // pred_check_branch
      %40 = sbr.rel (0) target = $region17
    $region16: #{tpu_custom_call.1} parent=1 // pred_region
      %42 = dma.done [#allocation3], 256
    $region17: #{tpu_custom_call.1} parent=1 // pred_fallthru
      _
    // Predicated region
    $region18: #{tpu_custom_call.1} parent=1 // pred_check
      _
    $region19: #{tpu_custom_call.1} parent=1 // pred_check_branch
      %44 = sbr.rel (0) target = $region21
    $region20: #{tpu_custom_call.1} parent=1 // pred_region
      %46 = dma.done [#allocation6], 1536
    $region21: #{tpu_custom_call.1} parent=1 // pred_fallthru
      _
    %v48 = vld [vmem:[#allocation2] sm:$0xf]
    %v49 = vld [vmem:[#allocation2 + $0x4] sm:$0xf]
    %v50 = vld [vmem:[#allocation2 + $0x8] sm:$0xf]
    %v51 = vld [vmem:[#allocation2 + $0xc] sm:$0xf]
    %v52 = vld [vmem:[#allocation5] sm:$0xff]
    %v53 = vld [vmem:[#allocation5 + $0x8] sm:$0xf]
    %v54 = vld [vmem:[#allocation5 + $0xc] sm:$0xff]
    %v55 = vld [vmem:[#allocation5 + $0x14] sm:$0xf]
    %v56 = vld [vmem:[#allocation5 + $0x18] sm:$0xff]
    %v57 = vld [vmem:[#allocation5 + $0x20] sm:$0xf]
    %v58 = vld [vmem:[#allocation5 + $0x24] sm:$0xff]
    %v59 = vld [vmem:[#allocation5 + $0x2c] sm:$0xf]
    %v60 = vld [vmem:[#allocation5 + $0x30] sm:$0xff]
    %v61 = vld [vmem:[#allocation5 + $0x38] sm:$0xf]
    %v62 = vld [vmem:[#allocation5 + $0x3c] sm:$0xff]
    %v63 = vld [vmem:[#allocation5 + $0x44] sm:$0xf]
    %v64 = vld [vmem:[#allocation5 + $0x48] sm:$0xff]
    %v65 = vld [vmem:[#allocation5 + $0x50] sm:$0xf]
    %v66 = vld [vmem:[#allocation5 + $0x54] sm:$0xff]
    %v67 = vld [vmem:[#allocation5 + $0x5c] sm:$0xf]
    %v72 = vunpack.c.l.b16 %v48
    %v73 = vunpack.c.l.b16 %v49
    %v74 = vunpack.c.l.b16 %v50
    %v75 = vunpack.c.l.b16 %v51
    %v76 = vpack.c.b16 %v73, %v72
    %v77 = vpack.c.b16 %v75, %v74
    %v94 = vunpack.c.l.b16 %v52
    %v95 = vunpack.c.h.b16 %v52
    %v96 = vunpack.c.l.b16 %v53
    %v97 = vunpack.c.l.b16 %v54
    %v98 = vunpack.c.h.b16 %v54
    %v99 = vunpack.c.l.b16 %v55
    %v100 = vunpack.c.l.b16 %v56
    %v101 = vunpack.c.h.b16 %v56
    %v102 = vunpack.c.l.b16 %v57
    %v103 = vunpack.c.l.b16 %v58
    %v104 = vunpack.c.h.b16 %v58
    %v105 = vunpack.c.l.b16 %v59
    %v106 = vunpack.c.l.b16 %v60
    %v107 = vunpack.c.h.b16 %v60
    %v108 = vunpack.c.l.b16 %v61
    %v109 = vunpack.c.l.b16 %v62
    %v110 = vunpack.c.h.b16 %v62
    %v111 = vunpack.c.l.b16 %v63
    %v112 = vunpack.c.l.b16 %v64
    %v113 = vunpack.c.h.b16 %v64
    %v114 = vunpack.c.l.b16 %v65
    %v115 = vunpack.c.l.b16 %v66
    %v116 = vunpack.c.h.b16 %v66
    %v117 = vunpack.c.l.b16 %v67
    %v118 = vpack.c.b16 %v97, %v94
    %v119 = vpack.c.b16 %v98, %v95
    %v120 = vpack.c.b16 %v99, %v96
    %v121 = vpack.c.b16 %v103, %v100
    %v122 = vpack.c.b16 %v104, %v101
    %v123 = vpack.c.b16 %v105, %v102
    %v124 = vpack.c.b16 %v109, %v106
    %v125 = vpack.c.b16 %v110, %v107
    %v126 = vpack.c.b16 %v111, %v108
    %v127 = vpack.c.b16 %v115, %v112
    %v128 = vpack.c.b16 %v116, %v113
    %v129 = vpack.c.b16 %v117, %v114
    %vm142 = vcmask 523264
    %v144 = vsel %vm142, %v76, 0
    %v147 = vsel %vm142, %v77, 0
    %149 = vmatpush.bf16.msra.mxu0 0
    %150 = vmatpush.bf16.msra.mxu0 0
    %151 = vmatpush.bf16.msra.mxu0 0
    %152 = vmatpush.bf16.msra.mxu0 0
    %153 = vmatpush.bf16.msra.mxu0 %v127
    %154 = vmatpush.bf16.msra.mxu0 %v124
    %155 = vmatpush.bf16.msra.mxu0 %v121
    %156 = vmatpush.bf16.msra.mxu0 %v118
    %157 = vmatmul.bf16.gmra.mxu0 %v144
    %v158 = vpop.f32.mrf.mxu0
    %v159 = vadd.f32 0.0, %v158
    %v160 = vpop.f32.mrf.mxu0
    %v161 = vadd.f32 0.0, %v160
    %162 = vmatmul.bf16.gmra.mxu0 %v147
    %v163 = vpop.f32.mrf.mxu0
    %v164 = vadd.f32 0.0, %v163
    %v165 = vpop.f32.mrf.mxu0
    %v166 = vadd.f32 0.0, %v165
    %167 = vdwg.mxu0
    %168 = vmatpush.bf16.msra.mxu0 0
    %169 = vmatpush.bf16.msra.mxu0 0
    %170 = vmatpush.bf16.msra.mxu0 0
    %171 = vmatpush.bf16.msra.mxu0 0
    %172 = vmatpush.bf16.msra.mxu0 %v128
    %173 = vmatpush.bf16.msra.mxu0 %v125
    %174 = vmatpush.bf16.msra.mxu0 %v122
    %175 = vmatpush.bf16.msra.mxu0 %v119
    %176 = vmatmul.bf16.gmra.mxu0 %v144
    %v177 = vpop.f32.mrf.mxu0
    %v178 = vadd.f32 0.0, %v177
    %v179 = vpop.f32.mrf.mxu0
    %v180 = vadd.f32 0.0, %v179
    %181 = vmatmul.bf16.gmra.mxu0 %v147
    %v182 = vpop.f32.mrf.mxu0
    %v183 = vadd.f32 0.0, %v182
    %v184 = vpop.f32.mrf.mxu0
    %v185 = vadd.f32 0.0, %v184
    %186 = vdwg.mxu0
    %187 = vmatpush.bf16.msra.mxu0 0
    %188 = vmatpush.bf16.msra.mxu0 0
    %189 = vmatpush.bf16.msra.mxu0 0
    %190 = vmatpush.bf16.msra.mxu0 0
    %191 = vmatpush.bf16.msra.mxu0 %v129
    %192 = vmatpush.bf16.msra.mxu0 %v126
    %193 = vmatpush.bf16.msra.mxu0 %v123
    %194 = vmatpush.bf16.msra.mxu0 %v120
    %195 = vmatmul.bf16.gmra.mxu0 %v144
    %v196 = vpop.f32.mrf.mxu0
    %v197 = vadd.f32 0.0, %v196
    %v198 = vpop.f32.mrf.mxu0
    %v199 = vadd.f32 0.0, %v198
    %200 = vmatmul.bf16.gmra.mxu0 %v147
    %v201 = vpop.f32.mrf.mxu0
    %v202 = vadd.f32 0.0, %v201
    %v203 = vpop.f32.mrf.mxu0
    %v204 = vadd.f32 0.0, %v203
    %205 = vdwg.mxu0
    %v206 = vlaneseq
    %v207 = vshrl.u32 %v206, 7
    %v208 = vadd.s32 %v207, 8
    %vm209 = vcmp.gt.s32.totalorder %v207, 0
    %vm210 = vcmp.gt.s32.totalorder %v208, 0
    %v211 = vrot.slane %v159, 7
    %v212 = vrot.slane %v161, 7
    %v213 = vrot.slane %v164, 7
    %v214 = vrot.slane %v166, 7
    %vm215 = vcmp.lt.s32.totalorder %v207, 1
    %v216 = vsel %vm215, %v213, %v214
    %v217 = vsel %vm215, %v212, %v213
    %v218 = vsel %vm215, %v211, %v212
    %v219 = vsel %vm215, %v214, %v211
    %v220 = vsel %vm209, %v219, 0.0
    %v221 = vsel %vm210, %v218, 0.0
    %v222 = vsel %vm209, %v217, 0.0
    %v223 = vsel %vm210, %v216, 0.0
    %vm224 = vcmp.lt.s32.totalorder %v207, 15
    %vm225 = vcmp.lt.s32.totalorder %v208, 15
    %v226 = vrot.slane %v197, 1
    %v227 = vrot.slane %v199, 1
    %v228 = vrot.slane %v202, 1
    %v229 = vrot.slane %v204, 1
    %vm230 = vcmp.lt.s32.totalorder %v207, 7
    %v231 = vsel %vm230, %v228, %v229
    %v232 = vsel %vm230, %v227, %v228
    %v233 = vsel %vm230, %v226, %v227
    %v234 = vsel %vm230, %v229, %v226
    %v235 = vsel %vm224, %v233, 0.0
    %v236 = vsel %vm225, %v232, 0.0
    %v237 = vsel %vm224, %v231, 0.0
    %v238 = vsel %vm225, %v234, 0.0
    %v239 = vadd.f32 %v178, %v220
    %v240 = vadd.f32 %v180, %v221
    %v241 = vadd.f32 %v183, %v222
    %v242 = vadd.f32 %v185, %v223
    %v243 = vadd.f32 %v239, %v235
    %v244 = vadd.f32 %v240, %v236
    %v245 = vadd.f32 %v241, %v237
    %v246 = vadd.f32 %v242, %v238
    %v247 = vld [vmem:[%s2] sm:$0x1]
    %v249 = vperm.slane %v247, 0
    %v251 = vadd.f32 %v243, %v249
    %v252 = vadd.f32 %v244, %v249
    %v253 = vadd.f32 %v245, %v249
    %v254 = vadd.f32 %v246, %v249
    %v255 = vpack.c.bf16 %v251, %v251
    %v256 = vpack.c.bf16 %v252, %v252
    %v257 = vpack.c.bf16 %v253, %v253
    %v258 = vpack.c.bf16 %v254, %v254
    %259 = vst [vmem:[#allocation7] sm:$0xf] %v255
    %260 = vst [vmem:[#allocation7 + $0x4] sm:$0xf] %v256
    %261 = vst [vmem:[#allocation7 + $0x8] sm:$0xf] %v257
    %262 = vst [vmem:[#allocation7 + $0xc] sm:$0xf] %v258
    // Predicated region
    $region22: #{tpu_custom_call.1} parent=1 // pred_check
      _
    $region23: #{tpu_custom_call.1} parent=1 // pred_check_branch
      %264 = sbr.rel (0) target = $region25
    $region24: #{tpu_custom_call.1} parent=1 // pred_region
      %266 = vsyncadd [#allocation4], 0
      %s267 = sshll.u32 [#allocation7], 4
      %s268 = int_to_ptr.vmem [resolvable:$true] %s267
      %s269 = sshll.u32 %s3, 4
      %s270 = int_to_ptr.hbm [resolvable:$true] %s269
      %275 = dma.vmem_to_hbm [thread:$0]  %s268, 256, %s270, [#allocation4], 64, 64, 4
    $region25: #{tpu_custom_call.1} parent=1 // pred_fallthru
      _
    // Predicated region
    $region26: #{tpu_custom_call.1} parent=1 // pred_check
      _
    $region27: #{tpu_custom_call.1} parent=1 // pred_check_branch
      %277 = sbr.rel (0) target = $region29
    $region28: #{tpu_custom_call.1} parent=1 // pred_region
      %279 = dma.done [#allocation4], 256
    $region29: #{tpu_custom_call.1} parent=1 // pred_fallthru
      _
    %280 = vsyncpa [#allocation3], 1
    %281 = vsyncpa [#allocation6], 1
    %282 = vsyncpa [#allocation4], 1

</llo_original>
